<compile_context>
chip_gen: v6e
topology: v6e:2x2x1
jax: 0.10.0
libtpu: 0.0.40
codegen_flags: <defaults>
</compile_context>

<pallas_src>
import jax
import jax.numpy as jnp
from jax.experimental import pallas as pl
from jax.experimental.pallas import tpu as pltpu

NUMACTIONS = 2
HIDDEN = 128


def _round_up(n, m):
    return ((n + m - 1) // m) * m


def pred_nn_kernel(x_ref, a_ref, wr_ref, br_ref, wa_ref, ba_ref, o_ref):
    # x_ref: (BM, 128), a_ref: (BM, 2)
    # wr_ref: (128, 128), br_ref: (1, 128)
    # wa_ref: (2, 128),   ba_ref: (1, 128)

    # decoder_r: Linear(128, 128) -> ReLU  (MXU path)
    r = jnp.dot(x_ref[...], wr_ref[...], preferred_element_type=jnp.float32)
    r = jnp.maximum(r + br_ref[...], 0.0)

    # decoder_action: Linear(2, 128) -> ReLU  (VPU path: K=2, avoid MXU padding)
    a = a_ref[...]
    wa = wa_ref[...]
    s = a[:, 0:1] * wa[0:1, :] + a[:, 1:2] * wa[1:2, :] + ba_ref[...]
    s = jnp.maximum(s, 0.0)

    o_ref[...] = (r + s).astype(o_ref.dtype)


def pred_nn_forward(x, a, wr, br, wa, ba, *, block_m=1024):
    """x: (B, 128), a: (B, 2), wr: (128, 128), br: (1, 128),
    wa: (2, 128), ba: (1, 128).  Returns (B, 128) float32."""
    B = x.shape[0]

    # Batch tile: sublane-aligned (multiple of 8), capped at block_m.
    bm = min(_round_up(block_m, 8), _round_up(B, 8))
    Bp = _round_up(B, bm)
    if Bp != B:
        x = jnp.pad(x, ((0, Bp - B), (0, 0)))
        a = jnp.pad(a, ((0, Bp - B), (0, 0)))

    grid = (Bp // bm,)

    out = pl.pallas_call(
        pred_nn_kernel,
        out_shape=jax.ShapeDtypeStruct((Bp, HIDDEN), jnp.float32),
        grid_spec=pl.GridSpec(
            grid=grid,
            in_specs=[
                pl.BlockSpec((bm, HIDDEN), lambda i: (i, 0)),          # x tile
                pl.BlockSpec((bm, NUMACTIONS), lambda i: (i, 0)),      # a tile
                pl.BlockSpec((HIDDEN, HIDDEN), lambda i: (0, 0)),      # Wr (resident)
                pl.BlockSpec((1, HIDDEN), lambda i: (0, 0)),           # br (resident)
                pl.BlockSpec((NUMACTIONS, HIDDEN), lambda i: (0, 0)),  # Wa (resident)
                pl.BlockSpec((1, HIDDEN), lambda i: (0, 0)),           # ba (resident)
            ],
            out_specs=pl.BlockSpec((bm, HIDDEN), lambda i: (i, 0)),
        ),
        compiler_params=pltpu.CompilerParams(
            dimension_semantics=("parallel",),
        ),
    )(x, a, wr, br, wa, ba)

    return out[:B]


def reference_forward(x, a, wr, br, wa, ba):
    r = jnp.maximum(x @ wr + br, 0.0)
    s = jnp.maximum(a @ wa + ba, 0.0)
    return r + s


if __name__ == "__main__":
    key = jax.random.PRNGKey(0)
    k_x, k_a, k_wr, k_br, k_wa, k_ba = jax.random.split(key, 6)

    B = 256           # small batch; exercises the grid with block_m=128
    BLOCK_M = 128

    # Parameters mirroring nn.Linear shapes, stored pre-transposed (in, out):
    #   decoder_r:      weight (128, 128) -> wr (128, 128), bias -> br (1, 128)
    #   decoder_action: weight (128, 2)   -> wa (2, 128),   bias -> ba (1, 128)
    wr = jax.random.uniform(k_wr, (HIDDEN, HIDDEN), jnp.float32, -0.08, 0.08)
    br = jax.random.uniform(k_br, (1, HIDDEN), jnp.float32, -0.08, 0.08)
    wa = jax.random.uniform(k_wa, (NUMACTIONS, HIDDEN), jnp.float32, -0.5, 0.5)
    ba = jax.random.uniform(k_ba, (1, HIDDEN), jnp.float32, -0.5, 0.5)

    x = jax.random.normal(k_x, (B, HIDDEN), jnp.float32)
    a = jax.random.normal(k_a, (B, NUMACTIONS), jnp.float32)

    out = pred_nn_forward(x, a, wr, br, wa, ba, block_m=BLOCK_M)
    out = jax.block_until_ready(out)

    ref = reference_forward(x, a, wr, br, wa, ba)
    assert out.shape == (B, HIDDEN)
    assert jnp.allclose(out, ref, atol=1e-5, rtol=1e-5), "mismatch vs reference"

    print("KERNEL_OK")
</pallas_src>

<mosaic_0001>
module attributes {stable_mosaic.version = 11 : i64} {
  func.func @pred_nn_kernel(%arg0: i32, %arg1: memref<128x128xf32, #tpu.memory_space<vmem>>, %arg2: memref<128x2xf32, #tpu.memory_space<vmem>>, %arg3: memref<128x128xf32, #tpu.memory_space<vmem>>, %arg4: memref<1x128xf32, #tpu.memory_space<vmem>>, %arg5: memref<2x128xf32, #tpu.memory_space<vmem>>, %arg6: memref<1x128xf32, #tpu.memory_space<vmem>>, %arg7: memref<128x128xf32, #tpu.memory_space<vmem>>) attributes {dimension_semantics = [#tpu.dimension_semantics<parallel>], iteration_bounds = array<i64: 2>, scalar_prefetch = 0 : i64, scratch_operands = 0 : i64, tpu.core_type = #tpu.core_type<tc>, window_params = [{transform_indices = @transform_0, window_bounds = array<i64: 128, 128>}, {transform_indices = @transform_1, window_bounds = array<i64: 128, 2>}, {pipeline_mode = #tpu.pipeline_mode<synchronous>, transform_indices = @transform_2, window_bounds = array<i64: 128, 128>}, {pipeline_mode = #tpu.pipeline_mode<synchronous>, transform_indices = @transform_3, window_bounds = array<i64: 1, 128>}, {pipeline_mode = #tpu.pipeline_mode<synchronous>, transform_indices = @transform_4, window_bounds = array<i64: 2, 128>}, {pipeline_mode = #tpu.pipeline_mode<synchronous>, transform_indices = @transform_5, window_bounds = array<i64: 1, 128>}, {transform_indices = @transform_6, window_bounds = array<i64: 128, 128>}]} {
    %c0 = arith.constant 0 : index
    %c0_0 = arith.constant 0 : index
    %0 = vector.load %arg1[%c0, %c0_0] : memref<128x128xf32, #tpu.memory_space<vmem>>, vector<128x128xf32>
    %c0_1 = arith.constant 0 : index
    %c0_2 = arith.constant 0 : index
    %1 = vector.load %arg3[%c0_1, %c0_2] : memref<128x128xf32, #tpu.memory_space<vmem>>, vector<128x128xf32>
    %cst = arith.constant dense<0.000000e+00> : vector<128x128xf32>
    %2 = tpu.matmul %0, %1, %cst {dimension_numbers = #tpu.dot_dimension_numbers<[1], [0], [0], [1], [0, 0, 1, 1], [], []>} : vector<128x128xf32>, vector<128x128xf32>, vector<128x128xf32> -> vector<128x128xf32>
    %c0_3 = arith.constant 0 : index
    %c0_4 = arith.constant 0 : index
    %3 = vector.load %arg4[%c0_3, %c0_4] : memref<1x128xf32, #tpu.memory_space<vmem>>, vector<1x128xf32>
    %4 = vector.broadcast %3 : vector<1x128xf32> to vector<128x128xf32>
    %5 = arith.addf %2, %4 : vector<128x128xf32>
    %cst_5 = arith.constant 0.000000e+00 : f32
    %6 = vector.broadcast %cst_5 : f32 to vector<128x128xf32>
    %7 = arith.maximumf %5, %6 : vector<128x128xf32>
    %c0_6 = arith.constant 0 : index
    %c0_7 = arith.constant 0 : index
    %8 = vector.load %arg2[%c0_6, %c0_7] : memref<128x2xf32, #tpu.memory_space<vmem>>, vector<128x2xf32>
    %c0_8 = arith.constant 0 : index
    %c0_9 = arith.constant 0 : index
    %9 = vector.load %arg5[%c0_8, %c0_9] : memref<2x128xf32, #tpu.memory_space<vmem>>, vector<2x128xf32>
    %10 = vector.extract_strided_slice %8 {offsets = [0, 0], sizes = [128, 1], strides = [1, 1]} : vector<128x2xf32> to vector<128x1xf32>
    %11 = vector.extract_strided_slice %9 {offsets = [0, 0], sizes = [1, 128], strides = [1, 1]} : vector<2x128xf32> to vector<1x128xf32>
    %12 = vector.broadcast %10 : vector<128x1xf32> to vector<128x128xf32>
    %13 = vector.broadcast %11 : vector<1x128xf32> to vector<128x128xf32>
    %14 = arith.mulf %12, %13 : vector<128x128xf32>
    %15 = vector.extract_strided_slice %8 {offsets = [0, 1], sizes = [128, 1], strides = [1, 1]} : vector<128x2xf32> to vector<128x1xf32>
    %16 = vector.extract_strided_slice %9 {offsets = [1, 0], sizes = [1, 128], strides = [1, 1]} : vector<2x128xf32> to vector<1x128xf32>
    %17 = vector.broadcast %15 : vector<128x1xf32> to vector<128x128xf32>
    %18 = vector.broadcast %16 : vector<1x128xf32> to vector<128x128xf32>
    %19 = arith.mulf %17, %18 : vector<128x128xf32>
    %20 = arith.addf %14, %19 : vector<128x128xf32>
    %c0_10 = arith.constant 0 : index
    %c0_11 = arith.constant 0 : index
    %21 = vector.load %arg6[%c0_10, %c0_11] : memref<1x128xf32, #tpu.memory_space<vmem>>, vector<1x128xf32>
    %22 = vector.broadcast %21 : vector<1x128xf32> to vector<128x128xf32>
    %23 = arith.addf %20, %22 : vector<128x128xf32>
    %cst_12 = arith.constant 0.000000e+00 : f32
    %24 = vector.broadcast %cst_12 : f32 to vector<128x128xf32>
    %25 = arith.maximumf %23, %24 : vector<128x128xf32>
    %26 = arith.addf %7, %25 : vector<128x128xf32>
    %c0_13 = arith.constant 0 : index
    %c0_14 = arith.constant 0 : index
    %27 = vector.load %arg7[%c0_13, %c0_14] : memref<128x128xf32, #tpu.memory_space<vmem>>, vector<128x128xf32>
    tpu.vector_store %arg7[%c0_13, %c0_14], %26 {strides = array<i32>} : memref<128x128xf32, #tpu.memory_space<vmem>>, vector<128x128xf32>,
    return
  }
  func.func @transform_0(%arg0: i32) -> (i32, i32) {
    %c0_i32 = arith.constant 0 : i32
    %c0_i32_0 = arith.constant 0 : i32
    return %arg0, %c0_i32 : i32, i32
  }
  func.func @transform_1(%arg0: i32) -> (i32, i32) {
    %c0_i32 = arith.constant 0 : i32
    %c0_i32_0 = arith.constant 0 : i32
    return %arg0, %c0_i32 : i32, i32
  }
  func.func @transform_2(%arg0: i32) -> (i32, i32) {
    %c0_i32 = arith.constant 0 : i32
    %c0_i32_0 = arith.constant 0 : i32
    %c0_i32_1 = arith.constant 0 : i32
    return %c0_i32, %c0_i32_0 : i32, i32
  }
  func.func @transform_3(%arg0: i32) -> (i32, i32) {
    %c0_i32 = arith.constant 0 : i32
    %c0_i32_0 = arith.constant 0 : i32
    %c0_i32_1 = arith.constant 0 : i32
    return %c0_i32, %c0_i32_0 : i32, i32
  }
  func.func @transform_4(%arg0: i32) -> (i32, i32) {
    %c0_i32 = arith.constant 0 : i32
    %c0_i32_0 = arith.constant 0 : i32
    %c0_i32_1 = arith.constant 0 : i32
    return %c0_i32, %c0_i32_0 : i32, i32
  }
  func.func @transform_5(%arg0: i32) -> (i32, i32) {
    %c0_i32 = arith.constant 0 : i32
    %c0_i32_0 = arith.constant 0 : i32
    %c0_i32_1 = arith.constant 0 : i32
    return %c0_i32, %c0_i32_0 : i32, i32
  }
  func.func @transform_6(%arg0: i32) -> (i32, i32) {
    %c0_i32 = arith.constant 0 : i32
    %c0_i32_0 = arith.constant 0 : i32
    return %arg0, %c0_i32 : i32, i32
  }
}

</mosaic_0001>

<llo_original>
// kernel: tpu_custom_call.1
$region0: #{tpu_custom_call.1}
  #allocation0 [shape = 'u32[]', space=smem, size = 0x4, offset = 0x4, fixed_abs, tag = 'smem constant byte address 0x4 - core index']
  #allocation1 [shape = 'u32[144,128]{1,0:T(1,128)}', space=vmem, size = 0x12000, scoped, tag = 'internal scratch']
  %s0 = inlined_call_operand.vmem [shape: f32[256,128], index: 0, kind: input, shape index: {}]
  %s1 = inlined_call_operand.vmem [shape: f32[256,2], index: 1, kind: input, shape index: {}]
  %s2 = inlined_call_operand.hbm [shape: f32[128,128], index: 2, kind: input, shape index: {}]
  %s3 = inlined_call_operand.vmem [shape: f32[1,128], index: 3, kind: input, shape index: {}]
  %s4 = inlined_call_operand.vmem [shape: f32[2,128], index: 4, kind: input, shape index: {}]
  %s5 = inlined_call_operand.vmem [shape: f32[1,128], index: 5, kind: input, shape index: {}]
  %s6 = inlined_call_operand.hbm [shape: f32[256,128], index: 6, kind: output, shape index: {}]
  %s7 = sld [smem:[#allocation0]]
  $region61: #{tpu_custom_call.1} parent=0
    _
  %s9 = ssub.s32 1, %s7
  %s10 = scalar_select 0, %s9, %s7
  $region1: #{tpu_custom_call.1} parent=0
    #allocation2 [shape = 'u8[65536]{0}', space=vmem, size = 0x10000, scoped, tag = 'input window, operand 2, single buffered']
    #allocation3 [shape = 's32[2]{0}', space=sflag, size = 0x8, scoped, tag = 'scoped memory for tpu_custom_call.1']
    #allocation4 [shape = 's32[2]{0}', space=sflag, size = 0x8, scoped, tag = 'scoped memory for tpu_custom_call.1']
    #allocation5 [shape = 'u8[131072]{0}', space=vmem, size = 0x20000, scoped, tag = 'output window, operand 0']
    %11 = vsyncpa [#allocation3], 0
    %12 = vsyncpa [#allocation4], 0
    %s13 = scalar_lea.sflag [#allocation4], 1
    %14 = vsyncpa %s13, 0
    loop: start=0, step=1, limit=4
    $region2: #{tpu_custom_call.1} parent=1 // loop_pre_header
      _
    $region3: #{tpu_custom_call.1} parent=1 // loop_header
      %s16 = sphi 0, %s20
      %p17 = scmp.ge.s32.totalorder %s16, 4
      %s26 = sphi 0, %s28
      %s29 = sphi 0, %s26
      %s30 = sphi 0, %s29
      %s46 = sphi 0, %s30
      %s52 = sphi 0, %s54
      %s55 = sphi 0, %s52
      %s56 = sphi 0, %s55
      %s72 = sphi 0, %s56
      %s76 = sphi 0, %s76
      %s78 = sphi 0, %s76
      %s79 = sphi 0, %s78
      %s93 = sphi 0, %s79
      %s97 = sphi 0, %s97
      %s99 = sphi 0, %s97
      %s100 = sphi 0, %s99
      %s114 = sphi 0, %s100
      %s118 = sphi 0, %s118
      %s120 = sphi 0, %s118
      %s121 = sphi 0, %s120
      %s135 = sphi 0, %s121
      %s139 = sphi 0, %s139
      %s141 = sphi 0, %s139
      %s142 = sphi 0, %s141
      %s156 = sphi 0, %s142
      %s162 = sphi 0, %s164
      %s165 = sphi 0, %s162
      %s166 = sphi 0, %s165
      %s182 = sphi 0, %s166
    $region4: #{tpu_custom_call.1} parent=1 // loop_header_branch
      %19 = sbr.rel (%p17) target = $region8
    $region5: #{tpu_custom_call.1} parent=1 // loop_body
      %s21 = ssub.s32 %s16, 1
      %s22 = ssub.s32 %s16, 2
      %s23 = sadd.s32 %s16, 1
      %s24 = ssub.s32 %s16, %s23
      %p25 = scmp.eq.s32.totalorder %s24, 0
      %s27 = sadd.s32 %s26, 1
      %s28 = scalar_select %p25, %s26, %s27
      %p31 = pneg %p25
      %p32 = scmp.eq.s32.totalorder %s16, 1
      %p33 = por %p31, %p32
      %p34 = scmp.ne.s32.totalorder %s26, %s29
      %p35 = scmp.eq.s32.totalorder %s16, 0
      %p36 = por %p34, %p35
      %p37 = scmp.ne.s32.totalorder %s26, %s29
      %p38 = scmp.eq.s32.totalorder %s21, 1
      %p39 = por %p37, %p38
      %p40 = scmp.ne.s32.totalorder %s29, %s30
      %p41 = scmp.eq.s32.totalorder %s21, 0
      %p42 = por %p40, %p41
      %p43 = scmp.ne.s32.totalorder %s29, %s30
      %p44 = scmp.eq.s32.totalorder %s22, 1
      %p45 = por %p43, %p44
      %p47 = scmp.ne.s32.totalorder %s30, %s46
      %p48 = scmp.eq.s32.totalorder %s22, 0
      %p49 = por %p47, %p48
      %s50 = ssub.s32 %s16, %s23
      %p51 = scmp.eq.s32.totalorder %s50, 0
      %s53 = sadd.s32 %s52, 1
      %s54 = scalar_select %p51, %s52, %s53
      %p57 = pneg %p51
      %p58 = scmp.eq.s32.totalorder %s16, 1
      %p59 = por %p57, %p58
      %p60 = scmp.ne.s32.totalorder %s52, %s55
      %p61 = scmp.eq.s32.totalorder %s16, 0
      %p62 = por %p60, %p61
      %p63 = scmp.ne.s32.totalorder %s52, %s55
      %p64 = scmp.eq.s32.totalorder %s21, 1
      %p65 = por %p63, %p64
      %p66 = scmp.ne.s32.totalorder %s55, %s56
      %p67 = scmp.eq.s32.totalorder %s21, 0
      %p68 = por %p66, %p67
      %p69 = scmp.ne.s32.totalorder %s55, %s56
      %p70 = scmp.eq.s32.totalorder %s22, 1
      %p71 = por %p69, %p70
      %p73 = scmp.ne.s32.totalorder %s56, %s72
      %p74 = scmp.eq.s32.totalorder %s22, 0
      %p75 = por %p73, %p74
      %s77 = sadd.s32 %s76, 1
      %p80 = scmp.eq.s32.totalorder %s16, 1
      %p81 = scmp.ne.s32.totalorder %s76, %s78
      %p82 = scmp.eq.s32.totalorder %s16, 0
      %p83 = por %p81, %p82
      %p84 = scmp.ne.s32.totalorder %s76, %s78
      %p85 = scmp.eq.s32.totalorder %s21, 1
      %p86 = por %p84, %p85
      %p87 = scmp.ne.s32.totalorder %s78, %s79
      %p88 = scmp.eq.s32.totalorder %s21, 0
      %p89 = por %p87, %p88
      %p90 = scmp.ne.s32.totalorder %s78, %s79
      %p91 = scmp.eq.s32.totalorder %s22, 1
      %p92 = por %p90, %p91
      %p94 = scmp.ne.s32.totalorder %s79, %s93
      %p95 = scmp.eq.s32.totalorder %s22, 0
      %p96 = por %p94, %p95
      %s98 = sadd.s32 %s97, 1
      %p101 = scmp.eq.s32.totalorder %s16, 1
      %p102 = scmp.ne.s32.totalorder %s97, %s99
      %p103 = scmp.eq.s32.totalorder %s16, 0
      %p104 = por %p102, %p103
      %p105 = scmp.ne.s32.totalorder %s97, %s99
      %p106 = scmp.eq.s32.totalorder %s21, 1
      %p107 = por %p105, %p106
      %p108 = scmp.ne.s32.totalorder %s99, %s100
      %p109 = scmp.eq.s32.totalorder %s21, 0
      %p110 = por %p108, %p109
      %p111 = scmp.ne.s32.totalorder %s99, %s100
      %p112 = scmp.eq.s32.totalorder %s22, 1
      %p113 = por %p111, %p112
      %p115 = scmp.ne.s32.totalorder %s100, %s114
      %p116 = scmp.eq.s32.totalorder %s22, 0
      %p117 = por %p115, %p116
      %s119 = sadd.s32 %s118, 1
      %p122 = scmp.eq.s32.totalorder %s16, 1
      %p123 = scmp.ne.s32.totalorder %s118, %s120
      %p124 = scmp.eq.s32.totalorder %s16, 0
      %p125 = por %p123, %p124
      %p126 = scmp.ne.s32.totalorder %s118, %s120
      %p127 = scmp.eq.s32.totalorder %s21, 1
      %p128 = por %p126, %p127
      %p129 = scmp.ne.s32.totalorder %s120, %s121
      %p130 = scmp.eq.s32.totalorder %s21, 0
      %p131 = por %p129, %p130
      %p132 = scmp.ne.s32.totalorder %s120, %s121
      %p133 = scmp.eq.s32.totalorder %s22, 1
      %p134 = por %p132, %p133
      %p136 = scmp.ne.s32.totalorder %s121, %s135
      %p137 = scmp.eq.s32.totalorder %s22, 0
      %p138 = por %p136, %p137
      %s140 = sadd.s32 %s139, 1
      %p143 = scmp.eq.s32.totalorder %s16, 1
      %p144 = scmp.ne.s32.totalorder %s139, %s141
      %p145 = scmp.eq.s32.totalorder %s16, 0
      %p146 = por %p144, %p145
      %p147 = scmp.ne.s32.totalorder %s139, %s141
      %p148 = scmp.eq.s32.totalorder %s21, 1
      %p149 = por %p147, %p148
      %p150 = scmp.ne.s32.totalorder %s141, %s142
      %p151 = scmp.eq.s32.totalorder %s21, 0
      %p152 = por %p150, %p151
      %p153 = scmp.ne.s32.totalorder %s141, %s142
      %p154 = scmp.eq.s32.totalorder %s22, 1
      %p155 = por %p153, %p154
      %p157 = scmp.ne.s32.totalorder %s142, %s156
      %p158 = scmp.eq.s32.totalorder %s22, 0
      %p159 = por %p157, %p158
      %s160 = ssub.s32 %s16, %s23
      %p161 = scmp.eq.s32.totalorder %s160, 0
      %s163 = sadd.s32 %s162, 1
      %s164 = scalar_select %p161, %s162, %s163
      %p167 = pneg %p161
      %p168 = scmp.eq.s32.totalorder %s16, 1
      %p169 = por %p167, %p168
      %p170 = scmp.ne.s32.totalorder %s162, %s165
      %p171 = scmp.eq.s32.totalorder %s16, 0
      %p172 = por %p170, %p171
      %p173 = scmp.ne.s32.totalorder %s162, %s165
      %p174 = scmp.eq.s32.totalorder %s21, 1
      %p175 = por %p173, %p174
      %p176 = scmp.ne.s32.totalorder %s165, %s166
      %p177 = scmp.eq.s32.totalorder %s21, 0
      %p178 = por %p176, %p177
      %p179 = scmp.ne.s32.totalorder %s165, %s166
      %p180 = scmp.eq.s32.totalorder %s22, 1
      %p181 = por %p179, %p180
      %p183 = scmp.ne.s32.totalorder %s166, %s182
      %p184 = scmp.eq.s32.totalorder %s22, 0
      %p185 = por %p183, %p184
      %p186 = scmp.le.s32.totalorder 1, %s16
      %p187 = scmp.lt.s32.totalorder %s16, 3
      %p188 = pnand %p186, %p187
      %p189 = pneg %p188
      // Predicated region
      $region9: #{tpu_custom_call.1} parent=5 // pred_check
        _
      $region10: #{tpu_custom_call.1} parent=5 // pred_check_branch
        %191 = sbr.rel (%p188) target = $region12
      $region11: #{tpu_custom_call.1} parent=5 // pred_region
        %s192 = ssub.s32 %s16, 1
        // Predicated region
        $region13: #{tpu_custom_call.1} parent=11 // pred_check
          %p193 = pneg %p89
        $region14: #{tpu_custom_call.1} parent=11 // pred_check_branch
          %195 = sbr.rel (%p193) target = $region16
        $region15: #{tpu_custom_call.1} parent=11 // pred_region
          %s197 = ssub.s32 2048, 2048
          %198 = vsyncadd [#allocation3], %s197
          %s199 = sshll.u32 [#allocation2], 4
          %s200 = int_to_ptr.vmem [resolvable:$true] %s199
          %205 = dma.hbm_to_vmem [thread:$0]  %s2, 2048, %s200, [#allocation3], 128, 128, 8
        $region16: #{tpu_custom_call.1} parent=11 // pred_fallthru
          _
        // Predicated region
        $region17: #{tpu_custom_call.1} parent=11 // pred_check
          %p206 = pneg %p110
        $region18: #{tpu_custom_call.1} parent=11 // pred_check_branch
          %208 = sbr.rel (%p206) target = $region20
        $region19: #{tpu_custom_call.1} parent=11 // pred_region
          _
        $region20: #{tpu_custom_call.1} parent=11 // pred_fallthru
          _
        // Predicated region
        $region21: #{tpu_custom_call.1} parent=11 // pred_check
          %p209 = pneg %p131
        $region22: #{tpu_custom_call.1} parent=11 // pred_check_branch
          %211 = sbr.rel (%p209) target = $region24
        $region23: #{tpu_custom_call.1} parent=11 // pred_region
          _
        $region24: #{tpu_custom_call.1} parent=11 // pred_fallthru
          _
        // Predicated region
        $region25: #{tpu_custom_call.1} parent=11 // pred_check
          %p212 = pneg %p152
        $region26: #{tpu_custom_call.1} parent=11 // pred_check_branch
          %214 = sbr.rel (%p212) target = $region28
        $region27: #{tpu_custom_call.1} parent=11 // pred_region
          _
        $region28: #{tpu_custom_call.1} parent=11 // pred_fallthru
          _
      $region12: #{tpu_custom_call.1} parent=5 // pred_fallthru
        _
      %p215 = scmp.lt.s32.totalorder %s16, 2
      // Predicated region
      $region29: #{tpu_custom_call.1} parent=5 // pred_check
        %p216 = pneg %p215
      $region30: #{tpu_custom_call.1} parent=5 // pred_check_branch
        %218 = sbr.rel (%p216) target = $region32
      $region31: #{tpu_custom_call.1} parent=5 // pred_region
        // Predicated region
        $region33: #{tpu_custom_call.1} parent=31 // pred_check
          %p219 = pneg %p36
        $region34: #{tpu_custom_call.1} parent=31 // pred_check_branch
          %221 = sbr.rel (%p219) target = $region36
        $region35: #{tpu_custom_call.1} parent=31 // pred_region
          %s222 = smul.u32 16, %s16
          %p223 = scmp.lt.s32.totalorder %s222, 31
          %s224 = scalar_select %p223, %s222, 31
          %s225 = smul.addr %s224, 8
          %s226 = scalar_lea.vmem %s0, %s225
          %s227 = smul.u32 16, %s16
        $region36: #{tpu_custom_call.1} parent=31 // pred_fallthru
          _
        // Predicated region
        $region37: #{tpu_custom_call.1} parent=31 // pred_check
          %p228 = pneg %p62
        $region38: #{tpu_custom_call.1} parent=31 // pred_check_branch
          %230 = sbr.rel (%p228) target = $region40
        $region39: #{tpu_custom_call.1} parent=31 // pred_region
          %s231 = smul.u32 16, %s16
          %p232 = scmp.lt.s32.totalorder %s231, 31
          %s233 = scalar_select %p232, %s231, 31
          %s234 = smul.addr %s233, 8
          %s235 = scalar_lea.vmem %s1, %s234
          %s236 = smul.u32 16, %s16
        $region40: #{tpu_custom_call.1} parent=31 // pred_fallthru
          _
      $region32: #{tpu_custom_call.1} parent=5 // pred_fallthru
        _
      %p237 = scmp.le.s32.totalorder 1, %s16
      %p238 = scmp.lt.s32.totalorder %s16, 3
      %p239 = pnand %p237, %p238
      %p240 = pneg %p239
      // Predicated region
      $region41: #{tpu_custom_call.1} parent=5 // pred_check
        _
      $region42: #{tpu_custom_call.1} parent=5 // pred_check_branch
        %242 = sbr.rel (%p239) target = $region44
      $region43: #{tpu_custom_call.1} parent=5 // pred_region
        %s243 = ssub.s32 %s16, 1
        // Predicated region
        $region45: #{tpu_custom_call.1} parent=43 // pred_check
          %p244 = pneg %p89
        $region46: #{tpu_custom_call.1} parent=43 // pred_check_branch
          %246 = sbr.rel (%p244) target = $region48
        $region47: #{tpu_custom_call.1} parent=43 // pred_region
          %247 = dma.done [#allocation3], 2048
        $region48: #{tpu_custom_call.1} parent=43 // pred_fallthru
          _
        %s248 = smul.u32 16, %s21
        %p249 = scmp.lt.s32.totalorder %s248, 31
        %s250 = scalar_select %p249, %s248, 31
        %s251 = smul.addr %s250, 8
        %s252 = scalar_lea.vmem %s0, %s251
        %p253 = pneg %p42
        %p254 = pneg %p39
        %s255 = smul.u32 16, %s21
        %p256 = scmp.lt.s32.totalorder %s255, 31
        %s257 = scalar_select %p256, %s255, 31
        %s258 = smul.addr %s257, 8
        %s259 = scalar_lea.vmem %s1, %s258
        %p260 = pneg %p68
        %p261 = pneg %p65
        %p262 = pneg %p89
        %p263 = pneg %p86
        %p264 = pneg %p110
        %p265 = pneg %p107
        %p266 = pneg %p131
        %p267 = pneg %p128
        %p268 = pneg %p152
        %p269 = pneg %p149
        %p270 = pneg %p178
        %p271 = pneg %p175
        %s272 = sand.u32 %s165, 1
        %s273 = scalar_lea.sflag [#allocation4], %s272
        %s274 = sand.u32 %s165, 1
        %s275 = smul.addr %s274, 128
        %s276 = scalar_lea.vmem [#allocation5], %s275
        %s277 = smul.u32 16, %s21
        %p278 = scmp.lt.s32.totalorder %s277, 31
        %s279 = scalar_select %p278, %s277, 31
        %s280 = smul.addr %s279, 8
        %s281 = scalar_lea.vmem %s0, %s280
        %s282 = smul.u32 16, %s21
        %s283 = smul.u32 16, %s21
        %p284 = scmp.lt.s32.totalorder %s283, 31
        %s285 = scalar_select %p284, %s283, 31
        %s286 = smul.addr %s285, 8
        %s287 = scalar_lea.vmem %s1, %s286
        %s288 = smul.u32 16, %s21
        %s289 = smul.u32 16, %s21
        %v290 = vld [vmem:[%s281] sm:$0xff]
        %v291 = vld [vmem:[%s281 + $0x8] sm:$0xff]
        %v292 = vld [vmem:[%s281 + $0x10] sm:$0xff]
        %v293 = vld [vmem:[%s281 + $0x18] sm:$0xff]
        %v294 = vld [vmem:[%s281 + $0x20] sm:$0xff]
        %v295 = vld [vmem:[%s281 + $0x28] sm:$0xff]
        %v296 = vld [vmem:[%s281 + $0x30] sm:$0xff]
        %v297 = vld [vmem:[%s281 + $0x38] sm:$0xff]
        %v298 = vld [vmem:[%s281 + $0x40] sm:$0xff]
        %v299 = vld [vmem:[%s281 + $0x48] sm:$0xff]
        %v300 = vld [vmem:[%s281 + $0x50] sm:$0xff]
        %v301 = vld [vmem:[%s281 + $0x58] sm:$0xff]
        %v302 = vld [vmem:[%s281 + $0x60] sm:$0xff]
        %v303 = vld [vmem:[%s281 + $0x68] sm:$0xff]
        %v304 = vld [vmem:[%s281 + $0x70] sm:$0xff]
        %v305 = vld [vmem:[%s281 + $0x78] sm:$0xff]
        %v306 = vld [vmem:[#allocation2] sm:$0xff]
        %v307 = vld [vmem:[#allocation2 + $0x8] sm:$0xff]
        %v308 = vld [vmem:[#allocation2 + $0x10] sm:$0xff]
        %v309 = vld [vmem:[#allocation2 + $0x18] sm:$0xff]
        %v310 = vld [vmem:[#allocation2 + $0x20] sm:$0xff]
        %v311 = vld [vmem:[#allocation2 + $0x28] sm:$0xff]
        %v312 = vld [vmem:[#allocation2 + $0x30] sm:$0xff]
        %v313 = vld [vmem:[#allocation2 + $0x38] sm:$0xff]
        %v314 = vld [vmem:[#allocation2 + $0x40] sm:$0xff]
        %v315 = vld [vmem:[#allocation2 + $0x48] sm:$0xff]
        %v316 = vld [vmem:[#allocation2 + $0x50] sm:$0xff]
        %v317 = vld [vmem:[#allocation2 + $0x58] sm:$0xff]
        %v318 = vld [vmem:[#allocation2 + $0x60] sm:$0xff]
        %v319 = vld [vmem:[#allocation2 + $0x68] sm:$0xff]
        %v320 = vld [vmem:[#allocation2 + $0x70] sm:$0xff]
        %v321 = vld [vmem:[#allocation2 + $0x78] sm:$0xff]
        %v322 = vld [vmem:[%s3] sm:$0x1]
        %v324 = vlaneseq
        %v325 = vshrl.u32 %v324, 7
        %v326 = vsub.s32 0, %v325
        %v327 = vrot.slane %v322, %v326
        %329 = vmatprep.subr.mxu0 0.0
        %330 = vmatpush1.msra.mxu0 %v321
        %331 = vmatprep.subr.mxu0 0.0
        %332 = vmatpush1.msra.mxu0 %v320
        %333 = vmatprep.subr.mxu0 0.0
        %334 = vmatpush1.msra.mxu0 %v319
        %335 = vmatprep.subr.mxu0 0.0
        %336 = vmatpush1.msra.mxu0 %v318
        %337 = vmatprep.subr.mxu0 0.0
        %338 = vmatpush1.msra.mxu0 %v317
        %339 = vmatprep.subr.mxu0 0.0
        %340 = vmatpush1.msra.mxu0 %v316
        %341 = vmatprep.subr.mxu0 0.0
        %342 = vmatpush1.msra.mxu0 %v315
        %343 = vmatprep.subr.mxu0 0.0
        %344 = vmatpush1.msra.mxu0 %v314
        %345 = vmatprep.subr.mxu0 0.0
        %346 = vmatpush1.msra.mxu0 %v313
        %347 = vmatprep.subr.mxu0 0.0
        %348 = vmatpush1.msra.mxu0 %v312
        %349 = vmatprep.subr.mxu0 0.0
        %350 = vmatpush1.msra.mxu0 %v311
        %351 = vmatprep.subr.mxu0 0.0
        %352 = vmatpush1.msra.mxu0 %v310
        %353 = vmatprep.subr.mxu0 0.0
        %354 = vmatpush1.msra.mxu0 %v309
        %355 = vmatprep.subr.mxu0 0.0
        %356 = vmatpush1.msra.mxu0 %v308
        %357 = vmatprep.subr.mxu0 0.0
        %358 = vmatpush1.msra.mxu0 %v307
        %359 = vmatprep.subr.mxu0 0.0
        %360 = vmatpush1.msra.mxu0 %v306
        %361 = vmatprep.subr.mxu0 0.0
        %362 = vmatpush2.msra.mxu0 0.0
        %363 = vmatprep.subr.mxu0 0.0
        %364 = vmatpush2.msra.mxu0 0.0
        %365 = vmatprep.subr.mxu0 0.0
        %366 = vmatpush2.msra.mxu0 0.0
        %367 = vmatprep.subr.mxu0 0.0
        %368 = vmatpush2.msra.mxu0 0.0
        %369 = vmatprep.subr.mxu0 0.0
        %370 = vmatpush2.msra.mxu0 0.0
        %371 = vmatprep.subr.mxu0 0.0
        %372 = vmatpush2.msra.mxu0 0.0
        %373 = vmatprep.subr.mxu0 0.0
        %374 = vmatpush2.msra.mxu0 0.0
        %375 = vmatprep.subr.mxu0 0.0
        %376 = vmatpush2.msra.mxu0 0.0
        %377 = vmatprep.subr.mxu0 0.0
        %378 = vmatpush2.msra.mxu0 0.0
        %379 = vmatprep.subr.mxu0 0.0
        %380 = vmatpush2.msra.mxu0 0.0
        %381 = vmatprep.subr.mxu0 0.0
        %382 = vmatpush2.msra.mxu0 0.0
        %383 = vmatprep.subr.mxu0 0.0
        %384 = vmatpush2.msra.mxu0 0.0
        %385 = vmatprep.subr.mxu0 0.0
        %386 = vmatpush2.msra.mxu0 0.0
        %387 = vmatprep.subr.mxu0 0.0
        %388 = vmatpush2.msra.mxu0 0.0
        %389 = vmatprep.subr.mxu0 0.0
        %390 = vmatpush2.msra.mxu0 0.0
        %391 = vmatprep.subr.mxu0 0.0
        %392 = vmatpush2.msra.mxu0 0.0
        %393 = vmatprep.mubr.f32.mxu0 0.0
        %394 = vmatmul.mubr.f32.gmra.mxu0 %v290
        %v395 = vpop.f32.mrf.mxu0
        %v396 = vadd.f32 %v327, %v395
        %v397 = vpop.f32.mrf.mxu0
        %398 = vmatprep.mubr.f32.mxu0 0.0
        %399 = vmatmul.mubr.f32.gmra.mxu0 %v291
        %v400 = vpop.f32.mrf.mxu0
        %v401 = vadd.f32 %v327, %v400
        %v402 = vpop.f32.mrf.mxu0
        %403 = vmatprep.mubr.f32.mxu0 0.0
        %404 = vmatmul.mubr.f32.gmra.mxu0 %v292
        %v405 = vpop.f32.mrf.mxu0
        %v406 = vadd.f32 %v327, %v405
        %v407 = vpop.f32.mrf.mxu0
        %408 = vmatprep.mubr.f32.mxu0 0.0
        %409 = vmatmul.mubr.f32.gmra.mxu0 %v293
        %v410 = vpop.f32.mrf.mxu0
        %v411 = vadd.f32 %v327, %v410
        %v412 = vpop.f32.mrf.mxu0
        %413 = vmatprep.mubr.f32.mxu0 0.0
        %414 = vmatmul.mubr.f32.gmra.mxu0 %v294
        %v415 = vpop.f32.mrf.mxu0
        %v416 = vadd.f32 %v327, %v415
        %v417 = vpop.f32.mrf.mxu0
        %418 = vmatprep.mubr.f32.mxu0 0.0
        %419 = vmatmul.mubr.f32.gmra.mxu0 %v295
        %v420 = vpop.f32.mrf.mxu0
        %v421 = vadd.f32 %v327, %v420
        %v422 = vpop.f32.mrf.mxu0
        %423 = vmatprep.mubr.f32.mxu0 0.0
        %424 = vmatmul.mubr.f32.gmra.mxu0 %v296
        %v425 = vpop.f32.mrf.mxu0
        %v426 = vadd.f32 %v327, %v425
        %v427 = vpop.f32.mrf.mxu0
        %428 = vmatprep.mubr.f32.mxu0 0.0
        %429 = vmatmul.mubr.f32.gmra.mxu0 %v297
        %v430 = vpop.f32.mrf.mxu0
        %v431 = vadd.f32 %v327, %v430
        %v432 = vpop.f32.mrf.mxu0
        %433 = vmatprep.mubr.f32.mxu0 0.0
        %434 = vmatmul.mubr.f32.gmra.mxu0 %v298
        %v435 = vpop.f32.mrf.mxu0
        %v436 = vadd.f32 %v327, %v435
        %v437 = vpop.f32.mrf.mxu0
        %438 = vmatprep.mubr.f32.mxu0 0.0
        %439 = vmatmul.mubr.f32.gmra.mxu0 %v299
        %v440 = vpop.f32.mrf.mxu0
        %v441 = vadd.f32 %v327, %v440
        %v442 = vpop.f32.mrf.mxu0
        %443 = vmatprep.mubr.f32.mxu0 0.0
        %444 = vmatmul.mubr.f32.gmra.mxu0 %v300
        %v445 = vpop.f32.mrf.mxu0
        %v446 = vadd.f32 %v327, %v445
        %v447 = vpop.f32.mrf.mxu0
        %448 = vmatprep.mubr.f32.mxu0 0.0
        %449 = vmatmul.mubr.f32.gmra.mxu0 %v301
        %v450 = vpop.f32.mrf.mxu0
        %v451 = vadd.f32 %v327, %v450
        %v452 = vpop.f32.mrf.mxu0
        %453 = vmatprep.mubr.f32.mxu0 0.0
        %454 = vmatmul.mubr.f32.gmra.mxu0 %v302
        %v455 = vpop.f32.mrf.mxu0
        %v456 = vadd.f32 %v327, %v455
        %v457 = vpop.f32.mrf.mxu0
        %458 = vmatprep.mubr.f32.mxu0 0.0
        %459 = vmatmul.mubr.f32.gmra.mxu0 %v303
        %v460 = vpop.f32.mrf.mxu0
        %v461 = vadd.f32 %v327, %v460
        %v462 = vpop.f32.mrf.mxu0
        %463 = vmatprep.mubr.f32.mxu0 0.0
        %464 = vmatmul.mubr.f32.gmra.mxu0 %v304
        %v465 = vpop.f32.mrf.mxu0
        %v466 = vadd.f32 %v327, %v465
        %v467 = vpop.f32.mrf.mxu0
        %468 = vmatprep.mubr.f32.mxu0 0.0
        %469 = vmatmul.mubr.f32.gmra.mxu0 %v305
        %v470 = vpop.f32.mrf.mxu0
        %v471 = vadd.f32 %v327, %v470
        %v472 = vpop.f32.mrf.mxu0
        %473 = vdwg.mxu0
        %v474 = vmax.f32 %v396, 0.0
        %v475 = vmax.f32 %v401, 0.0
        %v476 = vmax.f32 %v406, 0.0
        %v477 = vmax.f32 %v411, 0.0
        %v478 = vmax.f32 %v416, 0.0
        %v479 = vmax.f32 %v421, 0.0
        %v480 = vmax.f32 %v426, 0.0
        %v481 = vmax.f32 %v431, 0.0
        %v482 = vmax.f32 %v436, 0.0
        %v483 = vmax.f32 %v441, 0.0
        %v484 = vmax.f32 %v446, 0.0
        %v485 = vmax.f32 %v451, 0.0
        %v486 = vmax.f32 %v456, 0.0
        %v487 = vmax.f32 %v461, 0.0
        %v488 = vmax.f32 %v466, 0.0
        %v489 = vmax.f32 %v471, 0.0
        %v490 = vld [vmem:[%s287] sm:$0xff]
        %v491 = vld [vmem:[%s287 + $0x8] sm:$0xff]
        %v492 = vld [vmem:[%s287 + $0x10] sm:$0xff]
        %v493 = vld [vmem:[%s287 + $0x18] sm:$0xff]
        %v494 = vld [vmem:[%s287 + $0x20] sm:$0xff]
        %v495 = vld [vmem:[%s287 + $0x28] sm:$0xff]
        %v496 = vld [vmem:[%s287 + $0x30] sm:$0xff]
        %v497 = vld [vmem:[%s287 + $0x38] sm:$0xff]
        %v498 = vld [vmem:[%s287 + $0x40] sm:$0xff]
        %v499 = vld [vmem:[%s287 + $0x48] sm:$0xff]
        %v500 = vld [vmem:[%s287 + $0x50] sm:$0xff]
        %v501 = vld [vmem:[%s287 + $0x58] sm:$0xff]
        %v502 = vld [vmem:[%s287 + $0x60] sm:$0xff]
        %v503 = vld [vmem:[%s287 + $0x68] sm:$0xff]
        %v504 = vld [vmem:[%s287 + $0x70] sm:$0xff]
        %v505 = vld [vmem:[%s287 + $0x78] sm:$0xff]
        %v506 = vld [vmem:[%s4] sm:$0x3]
        %508 = vset.pattern.permute.xlu0 0
        %509 = vperm.xlu0 %508, %v490
        %v510 = vpop.permute.xlu0 %509
        %513 = vset.pattern.permute.xlu0 0
        %514 = vperm.xlu0 %513, %v491
        %v515 = vpop.permute.xlu0 %514
        %518 = vset.pattern.permute.xlu0 0
        %519 = vperm.xlu0 %518, %v492
        %v520 = vpop.permute.xlu0 %519
        %523 = vset.pattern.permute.xlu0 0
        %524 = vperm.xlu0 %523, %v493
        %v525 = vpop.permute.xlu0 %524
        %528 = vset.pattern.permute.xlu0 0
        %529 = vperm.xlu0 %528, %v494
        %v530 = vpop.permute.xlu0 %529
        %533 = vset.pattern.permute.xlu0 0
        %534 = vperm.xlu0 %533, %v495
        %v535 = vpop.permute.xlu0 %534
        %538 = vset.pattern.permute.xlu0 0
        %539 = vperm.xlu0 %538, %v496
        %v540 = vpop.permute.xlu0 %539
        %543 = vset.pattern.permute.xlu0 0
        %544 = vperm.xlu0 %543, %v497
        %v545 = vpop.permute.xlu0 %544
        %548 = vset.pattern.permute.xlu0 0
        %549 = vperm.xlu0 %548, %v498
        %v550 = vpop.permute.xlu0 %549
        %553 = vset.pattern.permute.xlu0 0
        %554 = vperm.xlu0 %553, %v499
        %v555 = vpop.permute.xlu0 %554
        %558 = vset.pattern.permute.xlu0 0
        %559 = vperm.xlu0 %558, %v500
        %v560 = vpop.permute.xlu0 %559
        %563 = vset.pattern.permute.xlu0 0
        %564 = vperm.xlu0 %563, %v501
        %v565 = vpop.permute.xlu0 %564
        %568 = vset.pattern.permute.xlu0 0
        %569 = vperm.xlu0 %568, %v502
        %v570 = vpop.permute.xlu0 %569
        %573 = vset.pattern.permute.xlu0 0
        %574 = vperm.xlu0 %573, %v503
        %v575 = vpop.permute.xlu0 %574
        %578 = vset.pattern.permute.xlu0 0
        %579 = vperm.xlu0 %578, %v504
        %v580 = vpop.permute.xlu0 %579
        %583 = vset.pattern.permute.xlu0 0
        %584 = vperm.xlu0 %583, %v505
        %v585 = vpop.permute.xlu0 %584
        %v587 = vlaneseq
        %v588 = vshrl.u32 %v587, 7
        %v589 = vsub.s32 0, %v588
        %v590 = vrot.slane %v506, %v589
        %v591 = vmul.f32 %v510, %v590
        %v592 = vmul.f32 %v515, %v590
        %v593 = vmul.f32 %v520, %v590
        %v594 = vmul.f32 %v525, %v590
        %v595 = vmul.f32 %v530, %v590
        %v596 = vmul.f32 %v535, %v590
        %v597 = vmul.f32 %v540, %v590
        %v598 = vmul.f32 %v545, %v590
        %v599 = vmul.f32 %v550, %v590
        %v600 = vmul.f32 %v555, %v590
        %v601 = vmul.f32 %v560, %v590
        %v602 = vmul.f32 %v565, %v590
        %v603 = vmul.f32 %v570, %v590
        %v604 = vmul.f32 %v575, %v590
        %v605 = vmul.f32 %v580, %v590
        %v606 = vmul.f32 %v585, %v590
        %607 = vset.pattern.permute.xlu0 1
        %608 = vperm.xlu0 %607, %v490
        %v609 = vpop.permute.xlu0 %608
        %611 = vset.pattern.permute.xlu0 1
        %612 = vperm.xlu0 %611, %v491
        %v613 = vpop.permute.xlu0 %612
        %615 = vset.pattern.permute.xlu0 1
        %616 = vperm.xlu0 %615, %v492
        %v617 = vpop.permute.xlu0 %616
        %619 = vset.pattern.permute.xlu0 1
        %620 = vperm.xlu0 %619, %v493
        %v621 = vpop.permute.xlu0 %620
        %623 = vset.pattern.permute.xlu0 1
        %624 = vperm.xlu0 %623, %v494
        %v625 = vpop.permute.xlu0 %624
        %627 = vset.pattern.permute.xlu0 1
        %628 = vperm.xlu0 %627, %v495
        %v629 = vpop.permute.xlu0 %628
        %631 = vset.pattern.permute.xlu0 1
        %632 = vperm.xlu0 %631, %v496
        %v633 = vpop.permute.xlu0 %632
        %635 = vset.pattern.permute.xlu0 1
        %636 = vperm.xlu0 %635, %v497
        %v637 = vpop.permute.xlu0 %636
        %639 = vset.pattern.permute.xlu0 1
        %640 = vperm.xlu0 %639, %v498
        %v641 = vpop.permute.xlu0 %640
        %643 = vset.pattern.permute.xlu0 1
        %644 = vperm.xlu0 %643, %v499
        %v645 = vpop.permute.xlu0 %644
        %647 = vset.pattern.permute.xlu0 1
        %648 = vperm.xlu0 %647, %v500
        %v649 = vpop.permute.xlu0 %648
        %651 = vset.pattern.permute.xlu0 1
        %652 = vperm.xlu0 %651, %v501
        %v653 = vpop.permute.xlu0 %652
        %655 = vset.pattern.permute.xlu0 1
        %656 = vperm.xlu0 %655, %v502
        %v657 = vpop.permute.xlu0 %656
        %659 = vset.pattern.permute.xlu0 1
        %660 = vperm.xlu0 %659, %v503
        %v661 = vpop.permute.xlu0 %660
        %663 = vset.pattern.permute.xlu0 1
        %664 = vperm.xlu0 %663, %v504
        %v665 = vpop.permute.xlu0 %664
        %667 = vset.pattern.permute.xlu0 1
        %668 = vperm.xlu0 %667, %v505
        %v669 = vpop.permute.xlu0 %668
        %v671 = vlaneseq
        %v672 = vshrl.u32 %v671, 7
        %v673 = vsub.s32 1, %v672
        %v674 = vrot.slane %v506, %v673
        %v675 = vmul.f32 %v609, %v674
        %v676 = vmul.f32 %v613, %v674
        %v677 = vmul.f32 %v617, %v674
        %v678 = vmul.f32 %v621, %v674
        %v679 = vmul.f32 %v625, %v674
        %v680 = vmul.f32 %v629, %v674
        %v681 = vmul.f32 %v633, %v674
        %v682 = vmul.f32 %v637, %v674
        %v683 = vmul.f32 %v641, %v674
        %v684 = vmul.f32 %v645, %v674
        %v685 = vmul.f32 %v649, %v674
        %v686 = vmul.f32 %v653, %v674
        %v687 = vmul.f32 %v657, %v674
        %v688 = vmul.f32 %v661, %v674
        %v689 = vmul.f32 %v665, %v674
        %v690 = vmul.f32 %v669, %v674
        %v691 = vadd.f32 %v591, %v675
        %v692 = vadd.f32 %v592, %v676
        %v693 = vadd.f32 %v593, %v677
        %v694 = vadd.f32 %v594, %v678
        %v695 = vadd.f32 %v595, %v679
        %v696 = vadd.f32 %v596, %v680
        %v697 = vadd.f32 %v597, %v681
        %v698 = vadd.f32 %v598, %v682
        %v699 = vadd.f32 %v599, %v683
        %v700 = vadd.f32 %v600, %v684
        %v701 = vadd.f32 %v601, %v685
        %v702 = vadd.f32 %v602, %v686
        %v703 = vadd.f32 %v603, %v687
        %v704 = vadd.f32 %v604, %v688
        %v705 = vadd.f32 %v605, %v689
        %v706 = vadd.f32 %v606, %v690
        %v707 = vld [vmem:[%s5] sm:$0x1]
        %v709 = vlaneseq
        %v710 = vshrl.u32 %v709, 7
        %v711 = vsub.s32 0, %v710
        %v712 = vrot.slane %v707, %v711
        %v714 = vadd.f32 %v691, %v712
        %v715 = vadd.f32 %v692, %v712
        %v716 = vadd.f32 %v693, %v712
        %v717 = vadd.f32 %v694, %v712
        %v718 = vadd.f32 %v695, %v712
        %v719 = vadd.f32 %v696, %v712
        %v720 = vadd.f32 %v697, %v712
        %v721 = vadd.f32 %v698, %v712
        %v722 = vadd.f32 %v699, %v712
        %v723 = vadd.f32 %v700, %v712
        %v724 = vadd.f32 %v701, %v712
        %v725 = vadd.f32 %v702, %v712
        %v726 = vadd.f32 %v703, %v712
        %v727 = vadd.f32 %v704, %v712
        %v728 = vadd.f32 %v705, %v712
        %v729 = vadd.f32 %v706, %v712
        %v730 = vmax.f32 %v714, 0.0
        %v731 = vmax.f32 %v715, 0.0
        %v732 = vmax.f32 %v716, 0.0
        %v733 = vmax.f32 %v717, 0.0
        %v734 = vmax.f32 %v718, 0.0
        %v735 = vmax.f32 %v719, 0.0
        %v736 = vmax.f32 %v720, 0.0
        %v737 = vmax.f32 %v721, 0.0
        %v738 = vmax.f32 %v722, 0.0
        %v739 = vmax.f32 %v723, 0.0
        %v740 = vmax.f32 %v724, 0.0
        %v741 = vmax.f32 %v725, 0.0
        %v742 = vmax.f32 %v726, 0.0
        %v743 = vmax.f32 %v727, 0.0
        %v744 = vmax.f32 %v728, 0.0
        %v745 = vmax.f32 %v729, 0.0
        %v746 = vadd.f32 %v474, %v730
        %v747 = vadd.f32 %v475, %v731
        %v748 = vadd.f32 %v476, %v732
        %v749 = vadd.f32 %v477, %v733
        %v750 = vadd.f32 %v478, %v734
        %v751 = vadd.f32 %v479, %v735
        %v752 = vadd.f32 %v480, %v736
        %v753 = vadd.f32 %v481, %v737
        %v754 = vadd.f32 %v482, %v738
        %v755 = vadd.f32 %v483, %v739
        %v756 = vadd.f32 %v484, %v740
        %v757 = vadd.f32 %v485, %v741
        %v758 = vadd.f32 %v486, %v742
        %v759 = vadd.f32 %v487, %v743
        %v760 = vadd.f32 %v488, %v744
        %v761 = vadd.f32 %v489, %v745
        %762 = vst [vmem:[%s276] sm:$0xff] %v746
        %763 = vst [vmem:[%s276 + $0x8] sm:$0xff] %v747
        %764 = vst [vmem:[%s276 + $0x10] sm:$0xff] %v748
        %765 = vst [vmem:[%s276 + $0x18] sm:$0xff] %v749
        %766 = vst [vmem:[%s276 + $0x20] sm:$0xff] %v750
        %767 = vst [vmem:[%s276 + $0x28] sm:$0xff] %v751
        %768 = vst [vmem:[%s276 + $0x30] sm:$0xff] %v752
        %769 = vst [vmem:[%s276 + $0x38] sm:$0xff] %v753
        %770 = vst [vmem:[%s276 + $0x40] sm:$0xff] %v754
        %771 = vst [vmem:[%s276 + $0x48] sm:$0xff] %v755
        %772 = vst [vmem:[%s276 + $0x50] sm:$0xff] %v756
        %773 = vst [vmem:[%s276 + $0x58] sm:$0xff] %v757
        %774 = vst [vmem:[%s276 + $0x60] sm:$0xff] %v758
        %775 = vst [vmem:[%s276 + $0x68] sm:$0xff] %v759
        %776 = vst [vmem:[%s276 + $0x70] sm:$0xff] %v760
        %777 = vst [vmem:[%s276 + $0x78] sm:$0xff] %v761
        %s778 = sand.u32 %s165, 1
        %s779 = scalar_lea.sflag [#allocation4], %s778
        %s780 = sand.u32 %s165, 1
        %s781 = smul.addr %s780, 128
        %s782 = scalar_lea.vmem [#allocation5], %s781
        // Predicated region
        $region49: #{tpu_custom_call.1} parent=43 // pred_check
          %p783 = pneg %p175
        $region50: #{tpu_custom_call.1} parent=43 // pred_check_branch
          %785 = sbr.rel (%p783) target = $region52
        $region51: #{tpu_custom_call.1} parent=43 // pred_region
          %s786 = smul.u32 16, %s21
          %s788 = ssub.s32 2048, 2048
          %789 = vsyncadd %s779, %s788
          %s790 = smul.addr %s786, 128
          %s791 = scalar_lea.hbm %s6, %s790
          %s792 = sshll.u32 %s782, 4
          %s793 = int_to_ptr.vmem [resolvable:$true] %s792
          %798 = dma.vmem_to_hbm [thread:$0]  %s793, 2048, %s791, %s779, 128, 128, 8
        $region52: #{tpu_custom_call.1} parent=43 // pred_fallthru
          _
      $region44: #{tpu_custom_call.1} parent=5 // pred_fallthru
        _
      %p799 = scmp.le.s32.totalorder 2, %s16
      // Predicated region
      $region53: #{tpu_custom_call.1} parent=5 // pred_check
        %p800 = pneg %p799
      $region54: #{tpu_custom_call.1} parent=5 // pred_check_branch
        %802 = sbr.rel (%p800) target = $region56
      $region55: #{tpu_custom_call.1} parent=5 // pred_region
        %s803 = ssub.s32 %s16, 2
        // Predicated region
        $region57: #{tpu_custom_call.1} parent=55 // pred_check
          %p804 = pneg %p181
        $region58: #{tpu_custom_call.1} parent=55 // pred_check_branch
          %806 = sbr.rel (%p804) target = $region60
        $region59: #{tpu_custom_call.1} parent=55 // pred_region
          %s807 = sand.u32 %s166, 1
          %s808 = scalar_lea.sflag [#allocation4], %s807
          %s809 = sand.u32 %s166, 1
          %s810 = smul.addr %s809, 128
          %s811 = scalar_lea.vmem [#allocation5], %s810
          %812 = dma.done %s808, 2048
        $region60: #{tpu_custom_call.1} parent=55 // pred_fallthru
          _
      $region56: #{tpu_custom_call.1} parent=5 // pred_fallthru
        _
    $region6: #{tpu_custom_call.1} parent=1 // loop_footer
      %s20 = sadd.s32 1, %s16
    $region7: #{tpu_custom_call.1} parent=1 // loop_footer_branch
      %15 = sbr.rel target = $region3
    $region8: #{tpu_custom_call.1} parent=1 // loop_exit
      _
    %813 = vsyncpa [#allocation3], 1
    %s814 = scalar_lea.sflag [#allocation3], 1
    %815 = vsyncpa %s814, 1
    %816 = vsyncpa [#allocation4], 1
    %s817 = scalar_lea.sflag [#allocation4], 1
    %818 = vsyncpa %s817, 1

</llo_original>
